<compile_context>
chip_gen: v5e
topology: v5e:2x2
jax: 0.10.0
libtpu: 0.0.40
codegen_flags: <defaults>
</compile_context>

<pallas_src>
import math
import jax
import jax.numpy as jnp
from jax import lax
from jax.experimental import pallas as pl
from jax.experimental.pallas import tpu as pltpu


def _round_up(x, m):
    return ((x + m - 1) // m) * m


# ----------------------------- Pallas kernel ------------------------------ #
def _generator_kernel(x_ref, w1_ref, b1_ref, w2_ref, b2_ref, o_ref):
    # In-kernel f32 -> bf16 cast of the x tile (VPU, hidden under MXU work).
    x_bf = x_ref[...].astype(jnp.bfloat16)
    # linear1: (tm, K)bf16 @ (K, H)bf16 -> f32 accumulate, + (1, H)f32
    h = jnp.dot(x_bf, w1_ref[...], preferred_element_type=jnp.float32)
    h = h + b1_ref[...]
    # exact GELU (matches transformers ACT2FN["gelu"] / torch F.gelu default)
    h = 0.5 * h * (1.0 + lax.erf(h * (1.0 / math.sqrt(2.0))))
    # linear2: (tm, H)bf16 @ (H, O_pad)bf16 -> f32 accumulate, + (1, O_pad)f32
    out = jnp.dot(h.astype(jnp.bfloat16), w2_ref[...],
                  preferred_element_type=jnp.float32)
    out = out + b2_ref[...]
    o_ref[...] = out.astype(o_ref.dtype)


# ----------------------- one-time parameter preparation -------------------- #
def prepare_params(w1, b1, w2, b2):
    """Hoisted out of the per-call path: pad O up to a multiple of 128 and cast
    matmul operands to bf16.  Weights are stored as (in_features, out_features)."""
    K, H = w1.shape
    O = w2.shape[1]
    O_pad = _round_up(O, 128)

    w1_p = w1.astype(jnp.bfloat16)
    b1_p = b1.reshape(1, H).astype(jnp.float32)

    w2_pad = jnp.zeros((H, O_pad), jnp.float32).at[:, :O].set(w2.astype(jnp.float32))
    w2_p = w2_pad.astype(jnp.bfloat16)
    b2_p = jnp.zeros((1, O_pad), jnp.float32).at[:, :O].set(
        b2.reshape(1, O).astype(jnp.float32))
    return w1_p, b1_p, w2_p, b2_p, O


def _choose_tm(m_aligned):
    """Pick a row-tile size (multiple of 16) that keeps >= 2 grid steps for
    mid-size M (so v7x's 2 TensorCores both get work) while staying VMEM-safe."""
    if m_aligned <= 256:
        return m_aligned            # single small block; grid=(1,) is fine here
    if m_aligned <= 1024:
        return 256                  # >= 2 (up to 4) steps -> megacore sharding
    return 512                      # large M: amortize per-step overhead


# --------------------------------- wrapper --------------------------------- #
def simple_generator_forward(x, w1_p, b1_p, w2_p, b2_p, output_dim):
    """x: (..., 768) float32.  Params from prepare_params().  Returns 1-D output
    equal to the torch module's x.view(-1)."""
    K = x.shape[-1]
    xf = x.reshape(-1, K)
    M = xf.shape[0]
    H = w1_p.shape[1]
    O_pad = w2_p.shape[1]

    # Row padding / tile size: multiples of 16, grid >= 2 when M is mid-size.
    M16 = _round_up(max(M, 16), 16)
    tm = _choose_tm(M16)
    M_pad = _round_up(M16, tm)

    if M_pad != M:
        xf = jnp.pad(xf, ((0, M_pad - M), (0, 0)))   # skipped when already aligned

    grid = (M_pad // tm,)

    cost = pl.CostEstimate(
        flops=2 * M_pad * (K * H + H * O_pad),
        transcendentals=M_pad * H,
        bytes_accessed=(M_pad * K * 4            # x (f32 in HBM)
                        + K * H * 2 + H * O_pad * 2  # bf16 weights
                        + (H + O_pad) * 4            # biases
                        + M_pad * O_pad * 4),        # f32 output
    )

    out = pl.pallas_call(
        _generator_kernel,
        out_shape=jax.ShapeDtypeStruct((M_pad, O_pad), jnp.float32),
        grid=grid,
        in_specs=[
            pl.BlockSpec((tm, K), lambda i: (i, 0)),      # x: blocked over rows (f32)
            pl.BlockSpec((K, H), lambda i: (0, 0)),       # w1: resident (bf16)
            pl.BlockSpec((1, H), lambda i: (0, 0)),       # b1: resident (f32)
            pl.BlockSpec((H, O_pad), lambda i: (0, 0)),   # w2: resident (bf16, padded)
            pl.BlockSpec((1, O_pad), lambda i: (0, 0)),   # b2: resident (f32, padded)
        ],
        out_specs=pl.BlockSpec((tm, O_pad), lambda i: (i, 0)),
        compiler_params=pltpu.CompilerParams(
            dimension_semantics=("parallel",),            # shards over 2 TCs on v7x
        ),
        cost_estimate=cost,
    )(xf, w1_p, b1_p, w2_p, b2_p)

    # Drop row padding and the zero-padded output columns, then flatten (view(-1)).
    # TODO(synk): if the consumer can accept the (M, O_pad) padded slab (or bf16),
    # this slice/reshape pass over the output can be skipped entirely.
    return out[:M, :output_dim].reshape(-1)


# ------------------------ deterministic param init ------------------------ #
def xavier_uniform(key, fan_in, fan_out, gain):
    # Matches torch.nn.init.xavier_uniform_: U(-a, a), a = gain * sqrt(6/(fan_in+fan_out))
    bound = gain * math.sqrt(6.0 / (fan_in + fan_out))
    # stored as (in_features, out_features) for the kernel layout
    return jax.random.uniform(
        key, (fan_in, fan_out), dtype=jnp.float32, minval=-bound, maxval=bound
    )


def make_params(key, input_dim, hidden_dim, output_dim):
    k1, k2 = jax.random.split(key)
    w1 = xavier_uniform(k1, input_dim, hidden_dim, gain=1e-07)
    b1 = jnp.zeros((hidden_dim,), jnp.float32)
    w2 = xavier_uniform(k2, hidden_dim, output_dim, gain=1e-07)
    b2 = jnp.zeros((output_dim,), jnp.float32)
    return w1, b1, w2, b2


# --------------------------------- main ------------------------------------ #
if __name__ == "__main__":
    # Config (small, but consistent with SimpleGenerator.__init__):
    #   input_dim      = 768                  (hardcoded in the module)
    #   generator_hdim = 128                  -> hidden_dim
    #   d_model=16, adapter_dim=4, adapt_layer_norm=False
    #   output_dim     = 16*4*2 + 16 + 4 = 148
    input_dim = 768
    hidden_dim = 128
    d_model, adapter_dim = 16, 4
    adapt_layer_norm = False
    output_dim = d_model * adapter_dim * 2 + d_model + adapter_dim
    if adapt_layer_norm:
        output_dim += 2 * d_model

    key = jax.random.PRNGKey(0)
    kx, kp = jax.random.split(key)

    batch, seq = 2, 8
    x = jax.random.normal(kx, (batch, seq, input_dim), dtype=jnp.float32)

    w1, b1, w2, b2 = make_params(kp, input_dim, hidden_dim, output_dim)
    w1_p, b1_p, w2_p, b2_p, out_dim = prepare_params(w1, b1, w2, b2)

    y = simple_generator_forward(x, w1_p, b1_p, w2_p, b2_p, out_dim)
    y = jax.block_until_ready(y)

    # Reference with the same bf16 roundings the kernel applies (f32 accumulation),
    # so the check isolates kernel correctness rather than bf16 quantization.
    xf = x.reshape(-1, input_dim)
    x_r = xf.astype(jnp.bfloat16).astype(jnp.float32)
    w1_r = w1.astype(jnp.bfloat16).astype(jnp.float32)
    w2_r = w2.astype(jnp.bfloat16).astype(jnp.float32)
    ref_h = x_r @ w1_r + b1
    ref_h = 0.5 * ref_h * (1.0 + lax.erf(ref_h / math.sqrt(2.0)))
    ref_h = ref_h.astype(jnp.bfloat16).astype(jnp.float32)
    ref = (ref_h @ w2_r + b2).reshape(-1)

    assert y.shape == (batch * seq * output_dim,)
    assert jnp.allclose(y, ref, rtol=1e-2, atol=1e-18), float(jnp.max(jnp.abs(y - ref)))

    print("KERNEL_OK")
</pallas_src>

<mosaic_0001>
module attributes {stable_mosaic.version = 11 : i64} {
  func.func @_generator_kernel(%arg0: i32, %arg1: memref<16x768xf32, #tpu.memory_space<vmem>>, %arg2: memref<768x128xbf16, #tpu.memory_space<vmem>>, %arg3: memref<1x128xf32, #tpu.memory_space<vmem>>, %arg4: memref<128x256xbf16, #tpu.memory_space<vmem>>, %arg5: memref<1x256xf32, #tpu.memory_space<vmem>>, %arg6: memref<16x256xf32, #tpu.memory_space<vmem>>) attributes {dimension_semantics = [#tpu.dimension_semantics<parallel>], iteration_bounds = array<i64: 1>, scalar_prefetch = 0 : i64, scratch_operands = 0 : i64, tpu.core_type = #tpu.core_type<tc>, window_params = [{transform_indices = @transform_0, window_bounds = array<i64: 16, 768>}, {pipeline_mode = #tpu.pipeline_mode<synchronous>, transform_indices = @transform_1, window_bounds = array<i64: 768, 128>}, {pipeline_mode = #tpu.pipeline_mode<synchronous>, transform_indices = @transform_2, window_bounds = array<i64: 1, 128>}, {pipeline_mode = #tpu.pipeline_mode<synchronous>, transform_indices = @transform_3, window_bounds = array<i64: 128, 256>}, {pipeline_mode = #tpu.pipeline_mode<synchronous>, transform_indices = @transform_4, window_bounds = array<i64: 1, 256>}, {transform_indices = @transform_5, window_bounds = array<i64: 16, 256>}]} {
    %c0 = arith.constant 0 : index
    %c0_0 = arith.constant 0 : index
    %0 = vector.load %arg1[%c0, %c0_0] : memref<16x768xf32, #tpu.memory_space<vmem>>, vector<16x768xf32>
    %1 = arith.truncf %0 : vector<16x768xf32> to vector<16x768xbf16>
    %c0_1 = arith.constant 0 : index
    %c0_2 = arith.constant 0 : index
    %2 = vector.load %arg2[%c0_1, %c0_2] : memref<768x128xbf16, #tpu.memory_space<vmem>>, vector<768x128xbf16>
    %cst = arith.constant dense<0.000000e+00> : vector<16x128xf32>
    %3 = tpu.matmul %1, %2, %cst {dimension_numbers = #tpu.dot_dimension_numbers<[1], [0], [0], [1], [0, 0, 1, 1], [], []>} : vector<16x768xbf16>, vector<768x128xbf16>, vector<16x128xf32> -> vector<16x128xf32>
    %c0_3 = arith.constant 0 : index
    %c0_4 = arith.constant 0 : index
    %4 = vector.load %arg3[%c0_3, %c0_4] : memref<1x128xf32, #tpu.memory_space<vmem>>, vector<1x128xf32>
    %5 = vector.broadcast %4 : vector<1x128xf32> to vector<16x128xf32>
    %6 = arith.addf %3, %5 : vector<16x128xf32>
    %cst_5 = arith.constant 5.000000e-01 : f32
    %7 = vector.broadcast %cst_5 : f32 to vector<16x128xf32>
    %8 = arith.mulf %7, %6 : vector<16x128xf32>
    %cst_6 = arith.constant 0.707106769 : f32
    %9 = vector.broadcast %cst_6 : f32 to vector<16x128xf32>
    %10 = arith.mulf %6, %9 : vector<16x128xf32>
    %11 = math.erf %10 : vector<16x128xf32>
    %cst_7 = arith.constant 1.000000e+00 : f32
    %12 = vector.broadcast %cst_7 : f32 to vector<16x128xf32>
    %13 = arith.addf %12, %11 : vector<16x128xf32>
    %14 = arith.mulf %8, %13 : vector<16x128xf32>
    %15 = arith.truncf %14 : vector<16x128xf32> to vector<16x128xbf16>
    %c0_8 = arith.constant 0 : index
    %c0_9 = arith.constant 0 : index
    %16 = vector.load %arg4[%c0_8, %c0_9] : memref<128x256xbf16, #tpu.memory_space<vmem>>, vector<128x256xbf16>
    %cst_10 = arith.constant dense<0.000000e+00> : vector<16x256xf32>
    %17 = tpu.matmul %15, %16, %cst_10 {dimension_numbers = #tpu.dot_dimension_numbers<[1], [0], [0], [1], [0, 0, 1, 1], [], []>} : vector<16x128xbf16>, vector<128x256xbf16>, vector<16x256xf32> -> vector<16x256xf32>
    %c0_11 = arith.constant 0 : index
    %c0_12 = arith.constant 0 : index
    %18 = vector.load %arg5[%c0_11, %c0_12] : memref<1x256xf32, #tpu.memory_space<vmem>>, vector<1x256xf32>
    %19 = vector.broadcast %18 : vector<1x256xf32> to vector<16x256xf32>
    %20 = arith.addf %17, %19 : vector<16x256xf32>
    %c0_13 = arith.constant 0 : index
    %c0_14 = arith.constant 0 : index
    %21 = vector.load %arg6[%c0_13, %c0_14] : memref<16x256xf32, #tpu.memory_space<vmem>>, vector<16x256xf32>
    tpu.vector_store %arg6[%c0_13, %c0_14], %20 {strides = array<i32>} : memref<16x256xf32, #tpu.memory_space<vmem>>, vector<16x256xf32>,
    return
  }
  func.func @transform_0(%arg0: i32) -> (i32, i32) {
    %c0_i32 = arith.constant 0 : i32
    %c0_i32_0 = arith.constant 0 : i32
    return %arg0, %c0_i32 : i32, i32
  }
  func.func @transform_1(%arg0: i32) -> (i32, i32) {
    %c0_i32 = arith.constant 0 : i32
    %c0_i32_0 = arith.constant 0 : i32
    %c0_i32_1 = arith.constant 0 : i32
    return %c0_i32, %c0_i32_0 : i32, i32
  }
  func.func @transform_2(%arg0: i32) -> (i32, i32) {
    %c0_i32 = arith.constant 0 : i32
    %c0_i32_0 = arith.constant 0 : i32
    %c0_i32_1 = arith.constant 0 : i32
    return %c0_i32, %c0_i32_0 : i32, i32
  }
  func.func @transform_3(%arg0: i32) -> (i32, i32) {
    %c0_i32 = arith.constant 0 : i32
    %c0_i32_0 = arith.constant 0 : i32
    %c0_i32_1 = arith.constant 0 : i32
    return %c0_i32, %c0_i32_0 : i32, i32
  }
  func.func @transform_4(%arg0: i32) -> (i32, i32) {
    %c0_i32 = arith.constant 0 : i32
    %c0_i32_0 = arith.constant 0 : i32
    %c0_i32_1 = arith.constant 0 : i32
    return %c0_i32, %c0_i32_0 : i32, i32
  }
  func.func @transform_5(%arg0: i32) -> (i32, i32) {
    %c0_i32 = arith.constant 0 : i32
    %c0_i32_0 = arith.constant 0 : i32
    return %arg0, %c0_i32 : i32, i32
  }
}

</mosaic_0001>

<llo_original>
// kernel: tpu_custom_call.1
$region0: #{tpu_custom_call.1}
  #allocation0 [shape = 'u32[]', space=smem, size = 0x4, offset = 0x4, fixed_abs, tag = 'smem constant byte address 0x4 - core index']
  #allocation1 [shape = 'u32[72,128]{1,0:T(1,128)}', space=vmem, size = 0x9000, scoped, tag = 'internal scratch']
  %s0 = inlined_call_operand.hbm [shape: f32[16,768], index: 0, kind: input, shape index: {}]
  %s1 = inlined_call_operand.hbm [shape: bf16[768,128], index: 1, kind: input, shape index: {}]
  %s2 = inlined_call_operand.vmem [shape: f32[1,128], index: 2, kind: input, shape index: {}]
  %s3 = inlined_call_operand.hbm [shape: bf16[128,256], index: 3, kind: input, shape index: {}]
  %s4 = inlined_call_operand.vmem [shape: f32[1,256], index: 4, kind: input, shape index: {}]
  %s5 = inlined_call_operand.hbm [shape: f32[16,256], index: 5, kind: output, shape index: {}]
  %s6 = sld [smem:[#allocation0]]
  $region42: #{tpu_custom_call.1} parent=0
    _
  %s8 = ssub.s32 1, %s6
  %s9 = scalar_select 0, %s8, %s6
  $region1: #{tpu_custom_call.1} parent=0
    #allocation2 [shape = 'u8[49152]{0}', space=vmem, size = 0xc000, scoped, tag = 'input window, operand 0, single buffered']
    #allocation3 [shape = 's32[1]{0}', space=sflag, size = 0x4, scoped, tag = 'scoped memory for tpu_custom_call.1']
    #allocation4 [shape = 's32[1]{0}', space=sflag, size = 0x4, scoped, tag = 'scoped memory for tpu_custom_call.1']
    #allocation5 [shape = 'u8[196608]{0}', space=vmem, size = 0x30000, scoped, tag = 'input window, operand 1, single buffered']
    #allocation6 [shape = 's32[1]{0}', space=sflag, size = 0x4, scoped, tag = 'scoped memory for tpu_custom_call.1']
    #allocation7 [shape = 'u8[65536]{0}', space=vmem, size = 0x10000, scoped, tag = 'input window, operand 3, single buffered']
    #allocation8 [shape = 'u8[16384]{0}', space=vmem, size = 0x4000, scoped, tag = 'output window, operand 0, single buffered']
    %10 = vsyncpa [#allocation3], 0
    %11 = vsyncpa [#allocation6], 0
    %12 = vsyncpa [#allocation4], 0
    // Predicated region
    $region2: #{tpu_custom_call.1} parent=1 // pred_check
      _
    $region3: #{tpu_custom_call.1} parent=1 // pred_check_branch
      %14 = sbr.rel (0) target = $region5
    $region4: #{tpu_custom_call.1} parent=1 // pred_region
      %16 = vsyncadd [#allocation3], 0
      %s17 = sshll.u32 %s0, 4
      %s18 = int_to_ptr.hbm [resolvable:$true] %s17
      %s19 = sshll.u32 [#allocation2], 4
      %s20 = int_to_ptr.vmem [resolvable:$true] %s19
      %25 = dma.hbm_to_vmem [thread:$0]  %s18, 1536, %s20, [#allocation3], 768, 768, 48
    $region5: #{tpu_custom_call.1} parent=1 // pred_fallthru
      _
    // Predicated region
    $region6: #{tpu_custom_call.1} parent=1 // pred_check
      _
    $region7: #{tpu_custom_call.1} parent=1 // pred_check_branch
      %27 = sbr.rel (0) target = $region9
    $region8: #{tpu_custom_call.1} parent=1 // pred_region
      %29 = vsyncadd [#allocation6], 0
      %s30 = sshll.u32 %s1, 4
      %s31 = int_to_ptr.hbm [resolvable:$true] %s30
      %s32 = sshll.u32 [#allocation5], 4
      %s33 = int_to_ptr.vmem [resolvable:$true] %s32
      %38 = dma.hbm_to_vmem [thread:$0]  %s31, 6144, %s33, [#allocation6], 64, 64, 4
    $region9: #{tpu_custom_call.1} parent=1 // pred_fallthru
      _
    // Predicated region
    $region10: #{tpu_custom_call.1} parent=1 // pred_check
      _
    $region11: #{tpu_custom_call.1} parent=1 // pred_check_branch
      %40 = sbr.rel (0) target = $region13
    $region12: #{tpu_custom_call.1} parent=1 // pred_region
      _
    $region13: #{tpu_custom_call.1} parent=1 // pred_fallthru
      _
    // Predicated region
    $region14: #{tpu_custom_call.1} parent=1 // pred_check
      _
    $region15: #{tpu_custom_call.1} parent=1 // pred_check_branch
      %42 = sbr.rel (0) target = $region17
    $region16: #{tpu_custom_call.1} parent=1 // pred_region
      %44 = vsyncadd [#allocation6], 0
      %s45 = sshll.u32 %s3, 4
      %s46 = int_to_ptr.hbm [resolvable:$true] %s45
      %s47 = sshll.u32 [#allocation7], 4
      %s48 = int_to_ptr.vmem [resolvable:$true] %s47
      %53 = dma.hbm_to_vmem [thread:$0]  %s46, 2048, %s48, [#allocation6], 128, 128, 8
    $region17: #{tpu_custom_call.1} parent=1 // pred_fallthru
      _
    // Predicated region
    $region18: #{tpu_custom_call.1} parent=1 // pred_check
      _
    $region19: #{tpu_custom_call.1} parent=1 // pred_check_branch
      %55 = sbr.rel (0) target = $region21
    $region20: #{tpu_custom_call.1} parent=1 // pred_region
      _
    $region21: #{tpu_custom_call.1} parent=1 // pred_fallthru
      _
    // Predicated region
    $region22: #{tpu_custom_call.1} parent=1 // pred_check
      _
    $region23: #{tpu_custom_call.1} parent=1 // pred_check_branch
      %57 = sbr.rel (0) target = $region25
    $region24: #{tpu_custom_call.1} parent=1 // pred_region
      %59 = dma.done [#allocation3], 1536
    $region25: #{tpu_custom_call.1} parent=1 // pred_fallthru
      _
    // Predicated region
    $region26: #{tpu_custom_call.1} parent=1 // pred_check
      _
    $region27: #{tpu_custom_call.1} parent=1 // pred_check_branch
      %61 = sbr.rel (0) target = $region29
    $region28: #{tpu_custom_call.1} parent=1 // pred_region
      %63 = dma.done [#allocation6], 6144
    $region29: #{tpu_custom_call.1} parent=1 // pred_fallthru
      _
    // Predicated region
    $region30: #{tpu_custom_call.1} parent=1 // pred_check
      _
    $region31: #{tpu_custom_call.1} parent=1 // pred_check_branch
      %65 = sbr.rel (0) target = $region33
    $region32: #{tpu_custom_call.1} parent=1 // pred_region
      %67 = dma.done [#allocation6], 2048
    $region33: #{tpu_custom_call.1} parent=1 // pred_fallthru
      _
    %v68 = vld [vmem:[#allocation2] sm:$0xff]
    %v69 = vld [vmem:[#allocation2 + $0x8] sm:$0xff]
    %v70 = vld [vmem:[#allocation2 + $0x10] sm:$0xff]
    %v71 = vld [vmem:[#allocation2 + $0x18] sm:$0xff]
    %v72 = vld [vmem:[#allocation2 + $0x20] sm:$0xff]
    %v73 = vld [vmem:[#allocation2 + $0x28] sm:$0xff]
    %v74 = vld [vmem:[#allocation2 + $0x30] sm:$0xff]
    %v75 = vld [vmem:[#allocation2 + $0x38] sm:$0xff]
    %v76 = vld [vmem:[#allocation2 + $0x40] sm:$0xff]
    %v77 = vld [vmem:[#allocation2 + $0x48] sm:$0xff]
    %v78 = vld [vmem:[#allocation2 + $0x50] sm:$0xff]
    %v79 = vld [vmem:[#allocation2 + $0x58] sm:$0xff]
    %v80 = vpack.c.bf16 %v74, %v68
    %v81 = vpack.c.bf16 %v75, %v69
    %v82 = vpack.c.bf16 %v76, %v70
    %v83 = vpack.c.bf16 %v77, %v71
    %v84 = vpack.c.bf16 %v78, %v72
    %v85 = vpack.c.bf16 %v79, %v73
    %v86 = vld [vmem:[#allocation5] sm:$0xf]
    %v87 = vld [vmem:[#allocation5 + $0x4] sm:$0xf]
    %v88 = vld [vmem:[#allocation5 + $0x8] sm:$0xf]
    %v89 = vld [vmem:[#allocation5 + $0xc] sm:$0xf]
    %v90 = vld [vmem:[#allocation5 + $0x10] sm:$0xf]
    %v91 = vld [vmem:[#allocation5 + $0x14] sm:$0xf]
    %v92 = vld [vmem:[#allocation5 + $0x18] sm:$0xf]
    %v93 = vld [vmem:[#allocation5 + $0x1c] sm:$0xf]
    %v94 = vld [vmem:[#allocation5 + $0x20] sm:$0xf]
    %v95 = vld [vmem:[#allocation5 + $0x24] sm:$0xf]
    %v96 = vld [vmem:[#allocation5 + $0x28] sm:$0xf]
    %v97 = vld [vmem:[#allocation5 + $0x2c] sm:$0xf]
    %v98 = vld [vmem:[#allocation5 + $0x30] sm:$0xf]
    %v99 = vld [vmem:[#allocation5 + $0x34] sm:$0xf]
    %v100 = vld [vmem:[#allocation5 + $0x38] sm:$0xf]
    %v101 = vld [vmem:[#allocation5 + $0x3c] sm:$0xf]
    %v102 = vld [vmem:[#allocation5 + $0x40] sm:$0xf]
    %v103 = vld [vmem:[#allocation5 + $0x44] sm:$0xf]
    %v104 = vld [vmem:[#allocation5 + $0x48] sm:$0xf]
    %v105 = vld [vmem:[#allocation5 + $0x4c] sm:$0xf]
    %v106 = vld [vmem:[#allocation5 + $0x50] sm:$0xf]
    %v107 = vld [vmem:[#allocation5 + $0x54] sm:$0xf]
    %v108 = vld [vmem:[#allocation5 + $0x58] sm:$0xf]
    %v109 = vld [vmem:[#allocation5 + $0x5c] sm:$0xf]
    %v110 = vld [vmem:[#allocation5 + $0x60] sm:$0xf]
    %v111 = vld [vmem:[#allocation5 + $0x64] sm:$0xf]
    %v112 = vld [vmem:[#allocation5 + $0x68] sm:$0xf]
    %v113 = vld [vmem:[#allocation5 + $0x6c] sm:$0xf]
    %v114 = vld [vmem:[#allocation5 + $0x70] sm:$0xf]
    %v115 = vld [vmem:[#allocation5 + $0x74] sm:$0xf]
    %v116 = vld [vmem:[#allocation5 + $0x78] sm:$0xf]
    %v117 = vld [vmem:[#allocation5 + $0x7c] sm:$0xf]
    %v118 = vld [vmem:[#allocation5 + $0x80] sm:$0xf]
    %v119 = vld [vmem:[#allocation5 + $0x84] sm:$0xf]
    %v120 = vld [vmem:[#allocation5 + $0x88] sm:$0xf]
    %v121 = vld [vmem:[#allocation5 + $0x8c] sm:$0xf]
    %v122 = vld [vmem:[#allocation5 + $0x90] sm:$0xf]
    %v123 = vld [vmem:[#allocation5 + $0x94] sm:$0xf]
    %v124 = vld [vmem:[#allocation5 + $0x98] sm:$0xf]
    %v125 = vld [vmem:[#allocation5 + $0x9c] sm:$0xf]
    %v126 = vld [vmem:[#allocation5 + $0xa0] sm:$0xf]
    %v127 = vld [vmem:[#allocation5 + $0xa4] sm:$0xf]
    %v128 = vld [vmem:[#allocation5 + $0xa8] sm:$0xf]
    %v129 = vld [vmem:[#allocation5 + $0xac] sm:$0xf]
    %v130 = vld [vmem:[#allocation5 + $0xb0] sm:$0xf]
    %v131 = vld [vmem:[#allocation5 + $0xb4] sm:$0xf]
    %v132 = vld [vmem:[#allocation5 + $0xb8] sm:$0xf]
    %v133 = vld [vmem:[#allocation5 + $0xbc] sm:$0xf]
    %v134 = vld [vmem:[#allocation5 + $0xc0] sm:$0xf]
    %v135 = vld [vmem:[#allocation5 + $0xc4] sm:$0xf]
    %v136 = vld [vmem:[#allocation5 + $0xc8] sm:$0xf]
    %v137 = vld [vmem:[#allocation5 + $0xcc] sm:$0xf]
    %v138 = vld [vmem:[#allocation5 + $0xd0] sm:$0xf]
    %v139 = vld [vmem:[#allocation5 + $0xd4] sm:$0xf]
    %v140 = vld [vmem:[#allocation5 + $0xd8] sm:$0xf]
    %v141 = vld [vmem:[#allocation5 + $0xdc] sm:$0xf]
    %v142 = vld [vmem:[#allocation5 + $0xe0] sm:$0xf]
    %v143 = vld [vmem:[#allocation5 + $0xe4] sm:$0xf]
    %v144 = vld [vmem:[#allocation5 + $0xe8] sm:$0xf]
    %v145 = vld [vmem:[#allocation5 + $0xec] sm:$0xf]
    %v146 = vld [vmem:[#allocation5 + $0xf0] sm:$0xf]
    %v147 = vld [vmem:[#allocation5 + $0xf4] sm:$0xf]
    %v148 = vld [vmem:[#allocation5 + $0xf8] sm:$0xf]
    %v149 = vld [vmem:[#allocation5 + $0xfc] sm:$0xf]
    %v150 = vld [vmem:[#allocation5 + $0x100] sm:$0xf]
    %v151 = vld [vmem:[#allocation5 + $0x104] sm:$0xf]
    %v152 = vld [vmem:[#allocation5 + $0x108] sm:$0xf]
    %v153 = vld [vmem:[#allocation5 + $0x10c] sm:$0xf]
    %v154 = vld [vmem:[#allocation5 + $0x110] sm:$0xf]
    %v155 = vld [vmem:[#allocation5 + $0x114] sm:$0xf]
    %v156 = vld [vmem:[#allocation5 + $0x118] sm:$0xf]
    %v157 = vld [vmem:[#allocation5 + $0x11c] sm:$0xf]
    %v158 = vld [vmem:[#allocation5 + $0x120] sm:$0xf]
    %v159 = vld [vmem:[#allocation5 + $0x124] sm:$0xf]
    %v160 = vld [vmem:[#allocation5 + $0x128] sm:$0xf]
    %v161 = vld [vmem:[#allocation5 + $0x12c] sm:$0xf]
    %v162 = vld [vmem:[#allocation5 + $0x130] sm:$0xf]
    %v163 = vld [vmem:[#allocation5 + $0x134] sm:$0xf]
    %v164 = vld [vmem:[#allocation5 + $0x138] sm:$0xf]
    %v165 = vld [vmem:[#allocation5 + $0x13c] sm:$0xf]
    %v166 = vld [vmem:[#allocation5 + $0x140] sm:$0xf]
    %v167 = vld [vmem:[#allocation5 + $0x144] sm:$0xf]
    %v168 = vld [vmem:[#allocation5 + $0x148] sm:$0xf]
    %v169 = vld [vmem:[#allocation5 + $0x14c] sm:$0xf]
    %v170 = vld [vmem:[#allocation5 + $0x150] sm:$0xf]
    %v171 = vld [vmem:[#allocation5 + $0x154] sm:$0xf]
    %v172 = vld [vmem:[#allocation5 + $0x158] sm:$0xf]
    %v173 = vld [vmem:[#allocation5 + $0x15c] sm:$0xf]
    %v174 = vld [vmem:[#allocation5 + $0x160] sm:$0xf]
    %v175 = vld [vmem:[#allocation5 + $0x164] sm:$0xf]
    %v176 = vld [vmem:[#allocation5 + $0x168] sm:$0xf]
    %v177 = vld [vmem:[#allocation5 + $0x16c] sm:$0xf]
    %v178 = vld [vmem:[#allocation5 + $0x170] sm:$0xf]
    %v179 = vld [vmem:[#allocation5 + $0x174] sm:$0xf]
    %v180 = vld [vmem:[#allocation5 + $0x178] sm:$0xf]
    %v181 = vld [vmem:[#allocation5 + $0x17c] sm:$0xf]
    %v182 = vld [vmem:[%s2] sm:$0x1]
    %v184 = vperm.slane %v182, 0
    %v282 = vunpack.c.l.b16 %v86
    %v283 = vunpack.c.l.b16 %v87
    %v284 = vunpack.c.l.b16 %v88
    %v285 = vunpack.c.l.b16 %v89
    %v286 = vunpack.c.l.b16 %v90
    %v287 = vunpack.c.l.b16 %v91
    %v288 = vunpack.c.l.b16 %v92
    %v289 = vunpack.c.l.b16 %v93
    %v290 = vunpack.c.l.b16 %v94
    %v291 = vunpack.c.l.b16 %v95
    %v292 = vunpack.c.l.b16 %v96
    %v293 = vunpack.c.l.b16 %v97
    %v294 = vunpack.c.l.b16 %v98
    %v295 = vunpack.c.l.b16 %v99
    %v296 = vunpack.c.l.b16 %v100
    %v297 = vunpack.c.l.b16 %v101
    %v298 = vunpack.c.l.b16 %v102
    %v299 = vunpack.c.l.b16 %v103
    %v300 = vunpack.c.l.b16 %v104
    %v301 = vunpack.c.l.b16 %v105
    %v302 = vunpack.c.l.b16 %v106
    %v303 = vunpack.c.l.b16 %v107
    %v304 = vunpack.c.l.b16 %v108
    %v305 = vunpack.c.l.b16 %v109
    %v306 = vunpack.c.l.b16 %v110
    %v307 = vunpack.c.l.b16 %v111
    %v308 = vunpack.c.l.b16 %v112
    %v309 = vunpack.c.l.b16 %v113
    %v310 = vunpack.c.l.b16 %v114
    %v311 = vunpack.c.l.b16 %v115
    %v312 = vunpack.c.l.b16 %v116
    %v313 = vunpack.c.l.b16 %v117
    %v314 = vunpack.c.l.b16 %v118
    %v315 = vunpack.c.l.b16 %v119
    %v316 = vunpack.c.l.b16 %v120
    %v317 = vunpack.c.l.b16 %v121
    %v318 = vunpack.c.l.b16 %v122
    %v319 = vunpack.c.l.b16 %v123
    %v320 = vunpack.c.l.b16 %v124
    %v321 = vunpack.c.l.b16 %v125
    %v322 = vunpack.c.l.b16 %v126
    %v323 = vunpack.c.l.b16 %v127
    %v324 = vunpack.c.l.b16 %v128
    %v325 = vunpack.c.l.b16 %v129
    %v326 = vunpack.c.l.b16 %v130
    %v327 = vunpack.c.l.b16 %v131
    %v328 = vunpack.c.l.b16 %v132
    %v329 = vunpack.c.l.b16 %v133
    %v330 = vunpack.c.l.b16 %v134
    %v331 = vunpack.c.l.b16 %v135
    %v332 = vunpack.c.l.b16 %v136
    %v333 = vunpack.c.l.b16 %v137
    %v334 = vunpack.c.l.b16 %v138
    %v335 = vunpack.c.l.b16 %v139
    %v336 = vunpack.c.l.b16 %v140
    %v337 = vunpack.c.l.b16 %v141
    %v338 = vunpack.c.l.b16 %v142
    %v339 = vunpack.c.l.b16 %v143
    %v340 = vunpack.c.l.b16 %v144
    %v341 = vunpack.c.l.b16 %v145
    %v342 = vunpack.c.l.b16 %v146
    %v343 = vunpack.c.l.b16 %v147
    %v344 = vunpack.c.l.b16 %v148
    %v345 = vunpack.c.l.b16 %v149
    %v346 = vunpack.c.l.b16 %v150
    %v347 = vunpack.c.l.b16 %v151
    %v348 = vunpack.c.l.b16 %v152
    %v349 = vunpack.c.l.b16 %v153
    %v350 = vunpack.c.l.b16 %v154
    %v351 = vunpack.c.l.b16 %v155
    %v352 = vunpack.c.l.b16 %v156
    %v353 = vunpack.c.l.b16 %v157
    %v354 = vunpack.c.l.b16 %v158
    %v355 = vunpack.c.l.b16 %v159
    %v356 = vunpack.c.l.b16 %v160
    %v357 = vunpack.c.l.b16 %v161
    %v358 = vunpack.c.l.b16 %v162
    %v359 = vunpack.c.l.b16 %v163
    %v360 = vunpack.c.l.b16 %v164
    %v361 = vunpack.c.l.b16 %v165
    %v362 = vunpack.c.l.b16 %v166
    %v363 = vunpack.c.l.b16 %v167
    %v364 = vunpack.c.l.b16 %v168
    %v365 = vunpack.c.l.b16 %v169
    %v366 = vunpack.c.l.b16 %v170
    %v367 = vunpack.c.l.b16 %v171
    %v368 = vunpack.c.l.b16 %v172
    %v369 = vunpack.c.l.b16 %v173
    %v370 = vunpack.c.l.b16 %v174
    %v371 = vunpack.c.l.b16 %v175
    %v372 = vunpack.c.l.b16 %v176
    %v373 = vunpack.c.l.b16 %v177
    %v374 = vunpack.c.l.b16 %v178
    %v375 = vunpack.c.l.b16 %v179
    %v376 = vunpack.c.l.b16 %v180
    %v377 = vunpack.c.l.b16 %v181
    %v378 = vpack.c.b16 %v283, %v282
    %v379 = vpack.c.b16 %v285, %v284
    %v380 = vpack.c.b16 %v287, %v286
    %v381 = vpack.c.b16 %v289, %v288
    %v382 = vpack.c.b16 %v291, %v290
    %v383 = vpack.c.b16 %v293, %v292
    %v384 = vpack.c.b16 %v295, %v294
    %v385 = vpack.c.b16 %v297, %v296
    %v386 = vpack.c.b16 %v299, %v298
    %v387 = vpack.c.b16 %v301, %v300
    %v388 = vpack.c.b16 %v303, %v302
    %v389 = vpack.c.b16 %v305, %v304
    %v390 = vpack.c.b16 %v307, %v306
    %v391 = vpack.c.b16 %v309, %v308
    %v392 = vpack.c.b16 %v311, %v310
    %v393 = vpack.c.b16 %v313, %v312
    %v394 = vpack.c.b16 %v315, %v314
    %v395 = vpack.c.b16 %v317, %v316
    %v396 = vpack.c.b16 %v319, %v318
    %v397 = vpack.c.b16 %v321, %v320
    %v398 = vpack.c.b16 %v323, %v322
    %v399 = vpack.c.b16 %v325, %v324
    %v400 = vpack.c.b16 %v327, %v326
    %v401 = vpack.c.b16 %v329, %v328
    %v402 = vpack.c.b16 %v331, %v330
    %v403 = vpack.c.b16 %v333, %v332
    %v404 = vpack.c.b16 %v335, %v334
    %v405 = vpack.c.b16 %v337, %v336
    %v406 = vpack.c.b16 %v339, %v338
    %v407 = vpack.c.b16 %v341, %v340
    %v408 = vpack.c.b16 %v343, %v342
    %v409 = vpack.c.b16 %v345, %v344
    %v410 = vpack.c.b16 %v347, %v346
    %v411 = vpack.c.b16 %v349, %v348
    %v412 = vpack.c.b16 %v351, %v350
    %v413 = vpack.c.b16 %v353, %v352
    %v414 = vpack.c.b16 %v355, %v354
    %v415 = vpack.c.b16 %v357, %v356
    %v416 = vpack.c.b16 %v359, %v358
    %v417 = vpack.c.b16 %v361, %v360
    %v418 = vpack.c.b16 %v363, %v362
    %v419 = vpack.c.b16 %v365, %v364
    %v420 = vpack.c.b16 %v367, %v366
    %v421 = vpack.c.b16 %v369, %v368
    %v422 = vpack.c.b16 %v371, %v370
    %v423 = vpack.c.b16 %v373, %v372
    %v424 = vpack.c.b16 %v375, %v374
    %v425 = vpack.c.b16 %v377, %v376
    %474 = vmatpush.bf16.msra.mxu0 %v385
    %475 = vmatpush.bf16.msra.mxu0 %v384
    %476 = vmatpush.bf16.msra.mxu0 %v383
    %477 = vmatpush.bf16.msra.mxu0 %v382
    %478 = vmatpush.bf16.msra.mxu0 %v381
    %479 = vmatpush.bf16.msra.mxu0 %v380
    %480 = vmatpush.bf16.msra.mxu0 %v379
    %481 = vmatpush.bf16.msra.mxu0 %v378
    %482 = vmatmul.bf16.gmra.mxu0 %v80
    %v483 = vpop.f32.mrf.mxu0
    %v484 = vadd.f32 %v184, %v483
    %v485 = vpop.f32.mrf.mxu0
    %v486 = vadd.f32 %v184, %v485
    %487 = vdwg.mxu0
    %488 = vmatpush.bf16.msra.mxu0 %v393
    %489 = vmatpush.bf16.msra.mxu0 %v392
    %490 = vmatpush.bf16.msra.mxu0 %v391
    %491 = vmatpush.bf16.msra.mxu0 %v390
    %492 = vmatpush.bf16.msra.mxu0 %v389
    %493 = vmatpush.bf16.msra.mxu0 %v388
    %494 = vmatpush.bf16.msra.mxu0 %v387
    %495 = vmatpush.bf16.msra.mxu0 %v386
    %496 = vmatmul.bf16.gmra.mxu0 %v81
    %v497 = vpop.f32.mrf.mxu0
    %v498 = vadd.f32 %v484, %v497
    %v499 = vpop.f32.mrf.mxu0
    %v500 = vadd.f32 %v486, %v499
    %501 = vdwg.mxu0
    %502 = vmatpush.bf16.msra.mxu0 %v401
    %503 = vmatpush.bf16.msra.mxu0 %v400
    %504 = vmatpush.bf16.msra.mxu0 %v399
    %505 = vmatpush.bf16.msra.mxu0 %v398
    %506 = vmatpush.bf16.msra.mxu0 %v397
    %507 = vmatpush.bf16.msra.mxu0 %v396
    %508 = vmatpush.bf16.msra.mxu0 %v395
    %509 = vmatpush.bf16.msra.mxu0 %v394
    %510 = vmatmul.bf16.gmra.mxu0 %v82
    %v511 = vpop.f32.mrf.mxu0
    %v512 = vadd.f32 %v498, %v511
    %v513 = vpop.f32.mrf.mxu0
    %v514 = vadd.f32 %v500, %v513
    %515 = vdwg.mxu0
    %516 = vmatpush.bf16.msra.mxu0 %v409
    %517 = vmatpush.bf16.msra.mxu0 %v408
    %518 = vmatpush.bf16.msra.mxu0 %v407
    %519 = vmatpush.bf16.msra.mxu0 %v406
    %520 = vmatpush.bf16.msra.mxu0 %v405
    %521 = vmatpush.bf16.msra.mxu0 %v404
    %522 = vmatpush.bf16.msra.mxu0 %v403
    %523 = vmatpush.bf16.msra.mxu0 %v402
    %524 = vmatmul.bf16.gmra.mxu0 %v83
    %v525 = vpop.f32.mrf.mxu0
    %v526 = vadd.f32 %v512, %v525
    %v527 = vpop.f32.mrf.mxu0
    %v528 = vadd.f32 %v514, %v527
    %529 = vdwg.mxu0
    %530 = vmatpush.bf16.msra.mxu0 %v417
    %531 = vmatpush.bf16.msra.mxu0 %v416
    %532 = vmatpush.bf16.msra.mxu0 %v415
    %533 = vmatpush.bf16.msra.mxu0 %v414
    %534 = vmatpush.bf16.msra.mxu0 %v413
    %535 = vmatpush.bf16.msra.mxu0 %v412
    %536 = vmatpush.bf16.msra.mxu0 %v411
    %537 = vmatpush.bf16.msra.mxu0 %v410
    %538 = vmatmul.bf16.gmra.mxu0 %v84
    %v539 = vpop.f32.mrf.mxu0
    %v540 = vadd.f32 %v526, %v539
    %v541 = vpop.f32.mrf.mxu0
    %v542 = vadd.f32 %v528, %v541
    %543 = vdwg.mxu0
    %544 = vmatpush.bf16.msra.mxu0 %v425
    %545 = vmatpush.bf16.msra.mxu0 %v424
    %546 = vmatpush.bf16.msra.mxu0 %v423
    %547 = vmatpush.bf16.msra.mxu0 %v422
    %548 = vmatpush.bf16.msra.mxu0 %v421
    %549 = vmatpush.bf16.msra.mxu0 %v420
    %550 = vmatpush.bf16.msra.mxu0 %v419
    %551 = vmatpush.bf16.msra.mxu0 %v418
    %552 = vmatmul.bf16.gmra.mxu0 %v85
    %v553 = vpop.f32.mrf.mxu0
    %v554 = vadd.f32 %v540, %v553
    %v555 = vpop.f32.mrf.mxu0
    %v556 = vadd.f32 %v542, %v555
    %557 = vdwg.mxu0
    %v558 = vmul.f32 %v554, 0.5
    %v559 = vmul.f32 %v556, 0.5
    %v560 = vmul.f32 %v554, 0.70710677
    %v561 = vmul.f32 %v556, 0.70710677
    %v562 = vmul.f32 %v560, %v560
    %v563 = vmin.f32 16.0, %v562
    %v564 = vmul.f32 %v563, 2.1237322e-06
    %v565 = vadd.f32 %v564, 0.00028619796
    %v566 = vmul.f32 %v563, %v565
    %v567 = vadd.f32 %v566, 0.0036580483
    %v568 = vmul.f32 %v563, %v567
    %v569 = vadd.f32 %v568, 0.05243302
    %v570 = vmul.f32 %v563, %v569
    %v571 = vadd.f32 %v570, 0.18741608
    %v572 = vmul.f32 %v563, %v571
    %v573 = vadd.f32 %v572, 1.1283791
    %v574 = vmul.f32 %v560, %v573
    %v575 = vmul.f32 %v563, 3.8918573e-05
    %v576 = vadd.f32 %v575, 0.001143296
    %v577 = vmul.f32 %v563, %v576
    %v578 = vadd.f32 %v577, 0.014752088
    %v579 = vmul.f32 %v563, %v578
    %v580 = vadd.f32 %v579, 0.112945676
    %v581 = vmul.f32 %v563, %v580
    %v582 = vadd.f32 %v581, 0.4994258
    %v583 = vmul.f32 %v563, %v582
    %v584 = vadd.f32 %v583, 1.0
    %v585 = vrcp.pop %v584
    %v586 = vmul.f32 %v584, %v585
    %v587 = vsub.f32 1.0, %v586
    %v588 = vmul.f32 %v585, %v587
    %v589 = vadd.f32 %v585, %v588
    %vm590 = vweird.f32 %v584
    %vm591 = vweird.f32 %v585
    %vm592 = vmor %vm590, %vm591
    %v593 = vsel %vm592, %v585, %v589
    %v594 = vand.u32 2147483647, %v584
    %vm595 = vcmp.eq.f32.partialorder %v594, 8.507059e+37
    %v596 = vand.u32 %v584, 2147483648
    %v597 = vor.u32 1.1754944e-38, %v596
    %v598 = vsel %vm595, %v597, %v593
    %v599 = vmul.f32 %v574, %v598
    %v600 = vmin.f32 %v599, 1.0
    %v601 = vmax.f32 %v600, -1.0
    %v602 = vmul.f32 %v561, %v561
    %v603 = vmin.f32 16.0, %v602
    %v604 = vmul.f32 %v603, 2.1237322e-06
    %v605 = vadd.f32 %v604, 0.00028619796
    %v606 = vmul.f32 %v603, %v605
    %v607 = vadd.f32 %v606, 0.0036580483
    %v608 = vmul.f32 %v603, %v607
    %v609 = vadd.f32 %v608, 0.05243302
    %v610 = vmul.f32 %v603, %v609
    %v611 = vadd.f32 %v610, 0.18741608
    %v612 = vmul.f32 %v603, %v611
    %v613 = vadd.f32 %v612, 1.1283791
    %v614 = vmul.f32 %v561, %v613
    %v615 = vmul.f32 %v603, 3.8918573e-05
    %v616 = vadd.f32 %v615, 0.001143296
    %v617 = vmul.f32 %v603, %v616
    %v618 = vadd.f32 %v617, 0.014752088
    %v619 = vmul.f32 %v603, %v618
    %v620 = vadd.f32 %v619, 0.112945676
    %v621 = vmul.f32 %v603, %v620
    %v622 = vadd.f32 %v621, 0.4994258
    %v623 = vmul.f32 %v603, %v622
    %v624 = vadd.f32 %v623, 1.0
    %v625 = vrcp.pop %v624
    %v626 = vmul.f32 %v624, %v625
    %v627 = vsub.f32 1.0, %v626
    %v628 = vmul.f32 %v625, %v627
    %v629 = vadd.f32 %v625, %v628
    %vm630 = vweird.f32 %v624
    %vm631 = vweird.f32 %v625
    %vm632 = vmor %vm630, %vm631
    %v633 = vsel %vm632, %v625, %v629
    %v634 = vand.u32 2147483647, %v624
    %vm635 = vcmp.eq.f32.partialorder %v634, 8.507059e+37
    %v636 = vand.u32 %v624, 2147483648
    %v637 = vor.u32 1.1754944e-38, %v636
    %v638 = vsel %vm635, %v637, %v633
    %v639 = vmul.f32 %v614, %v638
    %v640 = vmin.f32 %v639, 1.0
    %v641 = vmax.f32 %v640, -1.0
    %v642 = vadd.f32 %v601, 1.0
    %v643 = vadd.f32 %v641, 1.0
    %v644 = vmul.f32 %v558, %v642
    %v645 = vmul.f32 %v559, %v643
    %v646 = vpack.c.bf16 %v645, %v644
    %v647 = vld [vmem:[#allocation7] sm:$0xff]
    %v648 = vld [vmem:[#allocation7 + $0x8] sm:$0xff]
    %v649 = vld [vmem:[#allocation7 + $0x10] sm:$0xff]
    %v650 = vld [vmem:[#allocation7 + $0x18] sm:$0xff]
    %v651 = vld [vmem:[#allocation7 + $0x20] sm:$0xff]
    %v652 = vld [vmem:[#allocation7 + $0x28] sm:$0xff]
    %v653 = vld [vmem:[#allocation7 + $0x30] sm:$0xff]
    %v654 = vld [vmem:[#allocation7 + $0x38] sm:$0xff]
    %v655 = vld [vmem:[#allocation7 + $0x40] sm:$0xff]
    %v656 = vld [vmem:[#allocation7 + $0x48] sm:$0xff]
    %v657 = vld [vmem:[#allocation7 + $0x50] sm:$0xff]
    %v658 = vld [vmem:[#allocation7 + $0x58] sm:$0xff]
    %v659 = vld [vmem:[#allocation7 + $0x60] sm:$0xff]
    %v660 = vld [vmem:[#allocation7 + $0x68] sm:$0xff]
    %v661 = vld [vmem:[#allocation7 + $0x70] sm:$0xff]
    %v662 = vld [vmem:[#allocation7 + $0x78] sm:$0xff]
    %v663 = vld [vmem:[%s4] sm:$0x3]
    %v665 = vperm.slane %v663, 0
    %v666 = vperm.slane %v663, 1
    %v685 = vunpack.c.l.b16 %v647
    %v686 = vunpack.c.h.b16 %v647
    %v687 = vunpack.c.l.b16 %v648
    %v688 = vunpack.c.h.b16 %v648
    %v689 = vunpack.c.l.b16 %v649
    %v690 = vunpack.c.h.b16 %v649
    %v691 = vunpack.c.l.b16 %v650
    %v692 = vunpack.c.h.b16 %v650
    %v693 = vunpack.c.l.b16 %v651
    %v694 = vunpack.c.h.b16 %v651
    %v695 = vunpack.c.l.b16 %v652
    %v696 = vunpack.c.h.b16 %v652
    %v697 = vunpack.c.l.b16 %v653
    %v698 = vunpack.c.h.b16 %v653
    %v699 = vunpack.c.l.b16 %v654
    %v700 = vunpack.c.h.b16 %v654
    %v701 = vunpack.c.l.b16 %v655
    %v702 = vunpack.c.h.b16 %v655
    %v703 = vunpack.c.l.b16 %v656
    %v704 = vunpack.c.h.b16 %v656
    %v705 = vunpack.c.l.b16 %v657
    %v706 = vunpack.c.h.b16 %v657
    %v707 = vunpack.c.l.b16 %v658
    %v708 = vunpack.c.h.b16 %v658
    %v709 = vunpack.c.l.b16 %v659
    %v710 = vunpack.c.h.b16 %v659
    %v711 = vunpack.c.l.b16 %v660
    %v712 = vunpack.c.h.b16 %v660
    %v713 = vunpack.c.l.b16 %v661
    %v714 = vunpack.c.h.b16 %v661
    %v715 = vunpack.c.l.b16 %v662
    %v716 = vunpack.c.h.b16 %v662
    %v717 = vpack.c.b16 %v687, %v685
    %v718 = vpack.c.b16 %v688, %v686
    %v719 = vpack.c.b16 %v691, %v689
    %v720 = vpack.c.b16 %v692, %v690
    %v721 = vpack.c.b16 %v695, %v693
    %v722 = vpack.c.b16 %v696, %v694
    %v723 = vpack.c.b16 %v699, %v697
    %v724 = vpack.c.b16 %v700, %v698
    %v725 = vpack.c.b16 %v703, %v701
    %v726 = vpack.c.b16 %v704, %v702
    %v727 = vpack.c.b16 %v707, %v705
    %v728 = vpack.c.b16 %v708, %v706
    %v729 = vpack.c.b16 %v711, %v709
    %v730 = vpack.c.b16 %v712, %v710
    %v731 = vpack.c.b16 %v715, %v713
    %v732 = vpack.c.b16 %v716, %v714
    %749 = vmatpush.bf16.msra.mxu0 %v731
    %750 = vmatpush.bf16.msra.mxu0 %v729
    %751 = vmatpush.bf16.msra.mxu0 %v727
    %752 = vmatpush.bf16.msra.mxu0 %v725
    %753 = vmatpush.bf16.msra.mxu0 %v723
    %754 = vmatpush.bf16.msra.mxu0 %v721
    %755 = vmatpush.bf16.msra.mxu0 %v719
    %756 = vmatpush.bf16.msra.mxu0 %v717
    %757 = vmatmul.bf16.gmra.mxu0 %v646
    %v758 = vpop.f32.mrf.mxu0
    %v759 = vadd.f32 %v665, %v758
    %v760 = vpop.f32.mrf.mxu0
    %v761 = vadd.f32 %v665, %v760
    %762 = vdwg.mxu0
    %763 = vmatpush.bf16.msra.mxu0 %v732
    %764 = vmatpush.bf16.msra.mxu0 %v730
    %765 = vmatpush.bf16.msra.mxu0 %v728
    %766 = vmatpush.bf16.msra.mxu0 %v726
    %767 = vmatpush.bf16.msra.mxu0 %v724
    %768 = vmatpush.bf16.msra.mxu0 %v722
    %769 = vmatpush.bf16.msra.mxu0 %v720
    %770 = vmatpush.bf16.msra.mxu0 %v718
    %771 = vmatmul.bf16.gmra.mxu0 %v646
    %v772 = vpop.f32.mrf.mxu0
    %v773 = vadd.f32 %v666, %v772
    %v774 = vpop.f32.mrf.mxu0
    %v775 = vadd.f32 %v666, %v774
    %776 = vdwg.mxu0
    %777 = vst [vmem:[#allocation8] sm:$0xff] %v759
    %778 = vst [vmem:[#allocation8 + $0x8] sm:$0xff] %v773
    %779 = vst [vmem:[#allocation8 + $0x10] sm:$0xff] %v761
    %780 = vst [vmem:[#allocation8 + $0x18] sm:$0xff] %v775
    // Predicated region
    $region34: #{tpu_custom_call.1} parent=1 // pred_check
      _
    $region35: #{tpu_custom_call.1} parent=1 // pred_check_branch
      %782 = sbr.rel (0) target = $region37
    $region36: #{tpu_custom_call.1} parent=1 // pred_region
      %784 = vsyncadd [#allocation4], 0
      %s785 = sshll.u32 [#allocation8], 4
      %s786 = int_to_ptr.vmem [resolvable:$true] %s785
      %s787 = sshll.u32 %s5, 4
      %s788 = int_to_ptr.hbm [resolvable:$true] %s787
      %793 = dma.vmem_to_hbm [thread:$0]  %s786, 512, %s788, [#allocation4], 256, 256, 16
    $region37: #{tpu_custom_call.1} parent=1 // pred_fallthru
      _
    // Predicated region
    $region38: #{tpu_custom_call.1} parent=1 // pred_check
      _
    $region39: #{tpu_custom_call.1} parent=1 // pred_check_branch
      %795 = sbr.rel (0) target = $region41
    $region40: #{tpu_custom_call.1} parent=1 // pred_region
      %797 = dma.done [#allocation4], 512
    $region41: #{tpu_custom_call.1} parent=1 // pred_fallthru
      _
    %798 = vsyncpa [#allocation3], 1
    %799 = vsyncpa [#allocation6], 1
    %800 = vsyncpa [#allocation4], 1

</llo_original>
